<compile_context>
chip_gen: v5e
topology: v5e:2x2
jax: 0.10.0
libtpu: 0.0.40
codegen_flags: <defaults>
</compile_context>

<pallas_src>
import functools
import math

import jax
import jax.numpy as jnp
from jax import lax
from jax.experimental import pallas as pl
from jax.experimental.pallas import tpu as pltpu


def _round_up(x, m):
    return (x + m - 1) // m * m


# Conservative scratch/tile budget that fits every generation's physical VMEM
# (v5e/v6e: 128 MiB, v7x: 64 MiB) with headroom for Mosaic internals.
_VMEM_BUDGET = 44 * 1024 * 1024


def _tile_vmem_bytes(tm, tn, tk, comp_bytes, out_bytes, multi_k):
    """Double-buffered VMEM footprint of one grid step."""
    return (2 * tm * tk * comp_bytes          # x tile (double buffered)
            + 2 * tk * tn * comp_bytes        # weight tile (double buffered)
            + 2 * tn * 4                      # bias row (f32)
            + 2 * tm * tn * out_bytes         # output tile (double buffered)
            + (tm * tn * 4 if multi_k else 0))  # f32 accumulator scratch


# ---------------------------------------------------------------------------
# Kernels
# ---------------------------------------------------------------------------
def _linear_kernel_single_k(x_ref, w_ref, b_ref, o_ref):
    """Whole-K kernel: o = x @ w + b.

    x_ref: (tm, K)   activations (compute dtype)
    w_ref: (K, tn)   weight, canonical (K, N) layout (compute dtype)
    b_ref: (1, tn)   bias (f32)
    o_ref: (tm, tn)  output tile
    """
    acc = jnp.dot(x_ref[...], w_ref[...], preferred_element_type=jnp.float32)
    o_ref[...] = (acc + b_ref[...]).astype(o_ref.dtype)


def _linear_kernel_multi_k(x_ref, w_ref, b_ref, o_ref, acc_ref):
    """K reduced over grid axis 2 with a persistent f32 VMEM accumulator."""
    k = pl.program_id(2)

    @pl.when(k == 0)
    def _():
        acc_ref[...] = jnp.zeros_like(acc_ref)

    acc_ref[...] += jnp.dot(x_ref[...], w_ref[...],
                            preferred_element_type=jnp.float32)

    @pl.when(k == pl.num_programs(2) - 1)
    def _():
        o_ref[...] = (acc_ref[...] + b_ref[...]).astype(o_ref.dtype)


# ---------------------------------------------------------------------------
# Factory: prepare parameters once, return a jitted forward
# ---------------------------------------------------------------------------
def make_projection(weight, bias, *, compute_dtype=jnp.bfloat16,
                    tile_m=512, tile_n=512, tile_k=2048,
                    vmem_budget_bytes=_VMEM_BUDGET):
    """Builds the projection forward for nn.Linear weights.

    weight: (output_size, input_size)  PyTorch layout
    bias:   (output_size,)
    compute_dtype: dtype fed to the MXU (default bf16; accumulation stays
        f32). Use compute_dtype=None for exact f32 parity with the module.

    Weight cast / transpose / padding happen exactly once here (hoisted out
    of the per-call path).
    """
    N, K = weight.shape
    comp_dtype = (jnp.dtype(compute_dtype) if compute_dtype is not None
                  else jnp.dtype(weight.dtype))
    comp_bytes = comp_dtype.itemsize

    # ---- N tiling (fixed now so the weight can be padded once) -----------
    if N > tile_n:
        tn = tile_n
    else:
        tn = _round_up(N, 128)            # lane-dense output stores
        if tn >= 256:
            # v7x has 2 TensorCores: make the "parallel" j axis >= 2 blocks.
            tn = _round_up((tn + 1) // 2, 128)
    Np = _round_up(N, tn)

    # ---- K tiling: prefer one K step (x panel DMA'd exactly once) --------
    # Budget with the worst-case tm (= tile_m); the actual tm is <= tile_m.
    if _tile_vmem_bytes(tile_m, tn, K, comp_bytes, 4,
                        multi_k=False) <= vmem_budget_bytes:
        tk, Kp, multi_k = K, K, False
    else:
        multi_k = True
        tk = min(_round_up(K, 128), tile_k)
        while tk > 512 and _tile_vmem_bytes(tile_m, tn, tk, comp_bytes, 4,
                                            True) > vmem_budget_bytes:
            tk //= 2
        Kp = _round_up(K, tk)

    # ---- One-time parameter preparation (no per-call HBM pass) -----------
    w_prep = weight.astype(comp_dtype).T                   # (K, N) canonical
    if (Kp, Np) != (K, N):
        w_prep = jnp.pad(w_prep, ((0, Kp - K), (0, Np - N)))
    b_prep = bias.astype(jnp.float32).reshape(1, N)
    if Np != N:
        b_prep = jnp.pad(b_prep, ((0, 0), (0, Np - N)))

    @jax.jit
    def forward(x):
        *lead, Kx = x.shape
        assert Kx == K, "last dim of x must equal input_size"
        M = math.prod(lead)
        out_dtype = x.dtype
        out_bytes = jnp.dtype(out_dtype).itemsize

        x2d = x.reshape(M, K).astype(comp_dtype)

        # M tiling: full dim if it fits one tile (no padding), else tile+pad.
        tm = M if M <= tile_m else tile_m
        Mp = _round_up(M, tm)
        if (Mp, Kp) != (M, K):
            # TODO(synk): mask ragged M/K edge blocks in-kernel to avoid this
            # extra HBM pass over the activations when padding triggers.
            x2d = jnp.pad(x2d, ((0, Mp - M), (0, Kp - K)))

        gi, gj = Mp // tm, Np // tn
        need = _tile_vmem_bytes(tm, tn, tk, comp_bytes, out_bytes, multi_k)
        vmem_limit = int(min(max(need + (8 << 20), 32 << 20), 64 << 20))

        cost = pl.CostEstimate(
            flops=2 * Mp * Np * Kp,
            transcendentals=0,
            bytes_accessed=(Mp * Kp * comp_bytes * gj     # x re-read per j block
                            + Kp * Np * comp_bytes * gi   # w re-read per i block
                            + Np * 4                      # bias
                            + Mp * Np * out_bytes))       # output written once

        if multi_k:
            gk = Kp // tk
            grid = (gi, gj, gk)
            in_specs = [
                pl.BlockSpec((tm, tk), lambda i, j, k: (i, k)),   # x
                pl.BlockSpec((tk, tn), lambda i, j, k: (k, j)),   # w (K, N)
                pl.BlockSpec((1, tn), lambda i, j, k: (0, j)),    # bias
            ]
            out_specs = pl.BlockSpec((tm, tn), lambda i, j, k: (i, j))
            kernel = _linear_kernel_multi_k
            scratch = [pltpu.VMEM((tm, tn), jnp.float32)]
            semantics = ("parallel", "parallel", "arbitrary")
        else:
            grid = (gi, gj)
            in_specs = [
                pl.BlockSpec((tm, Kp), lambda i, j: (i, 0)),      # x panel
                pl.BlockSpec((Kp, tn), lambda i, j: (0, j)),      # w (K, N)
                pl.BlockSpec((1, tn), lambda i, j: (0, j)),       # bias
            ]
            out_specs = pl.BlockSpec((tm, tn), lambda i, j: (i, j))
            kernel = _linear_kernel_single_k
            scratch = []
            semantics = ("parallel", "parallel")

        out = pl.pallas_call(
            kernel,
            out_shape=jax.ShapeDtypeStruct((Mp, Np), out_dtype),
            grid_spec=pltpu.PrefetchScalarGridSpec(
                num_scalar_prefetch=0,
                grid=grid,
                in_specs=in_specs,
                out_specs=out_specs,
                scratch_shapes=scratch),
            compiler_params=pltpu.CompilerParams(
                dimension_semantics=semantics,
                vmem_limit_bytes=vmem_limit),
            cost_estimate=cost,
        )(x2d, w_prep, b_prep)

        if (Mp, Np) != (M, N):
            out = out[:M, :N]
        return out.reshape(*lead, N)

    return forward


# Convenience one-shot wrapper (prep cost is paid per call; prefer the factory).
def projection_forward(x, weight, bias, **kwargs):
    return make_projection(weight, bias, **kwargs)(x)


if __name__ == "__main__":
    # Small shapes consistent with the module: (batch, num_patches, input_size)
    batch, num_patches = 2, 8
    input_size, output_size = 32, 64

    key = jax.random.PRNGKey(0)
    kx, kw, kb = jax.random.split(key, 3)

    x = jax.random.normal(kx, (batch, num_patches, input_size), dtype=jnp.float32)
    # Deterministic parameter init (mimics nn.Linear's uniform(-1/sqrt(K), 1/sqrt(K)))
    bound = 1.0 / (input_size ** 0.5)
    weight = jax.random.uniform(kw, (output_size, input_size),
                                minval=-bound, maxval=bound, dtype=jnp.float32)
    bias = jax.random.uniform(kb, (output_size,),
                              minval=-bound, maxval=bound, dtype=jnp.float32)

    y_ref = jnp.einsum("bpk,nk->bpn", x, weight) + bias

    # 1) Default fast path: bf16 MXU compute, f32 accumulation.
    proj = make_projection(weight, bias)
    y = proj(x)
    jax.block_until_ready(y)
    assert y.shape == (batch, num_patches, output_size)
    assert jnp.allclose(y, y_ref, atol=5e-2, rtol=5e-2)

    # 2) Exact-parity path (f32 compute, matches the nn.Linear module numerics).
    proj_exact = make_projection(weight, bias, compute_dtype=None)
    y_exact = proj_exact(x)
    jax.block_until_ready(y_exact)
    assert jnp.allclose(y_exact, y_ref, atol=1e-5, rtol=1e-5)

    # 3) Smoke-test the multi-K-step (grid reduction + f32 accumulator) path
    #    by forcing the tiler off the single-K fast path.
    k2 = 256
    x2 = jax.random.normal(kx, (batch, num_patches, k2), dtype=jnp.float32)
    w2 = jax.random.uniform(kw, (output_size, k2),
                            minval=-0.06, maxval=0.06, dtype=jnp.float32)
    proj_mk = make_projection(w2, bias, compute_dtype=None,
                              tile_k=128, vmem_budget_bytes=1)
    y2 = proj_mk(x2)
    jax.block_until_ready(y2)
    y2_ref = jnp.einsum("bpk,nk->bpn", x2, w2) + bias
    assert jnp.allclose(y2, y2_ref, atol=1e-4, rtol=1e-4)

    print("KERNEL_OK")
</pallas_src>

<mosaic_0001>
module attributes {stable_mosaic.version = 11 : i64} {
  func.func @_linear_kernel_single_k(%arg0: i32, %arg1: i32, %arg2: memref<16x32xbf16, #tpu.memory_space<vmem>>, %arg3: memref<32x128xbf16, #tpu.memory_space<vmem>>, %arg4: memref<1x128xf32, #tpu.memory_space<vmem>>, %arg5: memref<16x128xf32, #tpu.memory_space<vmem>>) attributes {dimension_semantics = [#tpu.dimension_semantics<parallel>, #tpu.dimension_semantics<parallel>], iteration_bounds = array<i64: 1, 1>, scalar_prefetch = 0 : i64, scratch_operands = 0 : i64, tpu.core_type = #tpu.core_type<tc>, window_params = [{transform_indices = @transform_0, window_bounds = array<i64: 16, 32>}, {transform_indices = @transform_1, window_bounds = array<i64: 32, 128>}, {transform_indices = @transform_2, window_bounds = array<i64: 1, 128>}, {transform_indices = @transform_3, window_bounds = array<i64: 16, 128>}]} {
    %c0 = arith.constant 0 : index
    %c0_0 = arith.constant 0 : index
    %0 = vector.load %arg2[%c0, %c0_0] : memref<16x32xbf16, #tpu.memory_space<vmem>>, vector<16x32xbf16>
    %c0_1 = arith.constant 0 : index
    %c0_2 = arith.constant 0 : index
    %1 = vector.load %arg3[%c0_1, %c0_2] : memref<32x128xbf16, #tpu.memory_space<vmem>>, vector<32x128xbf16>
    %cst = arith.constant dense<0.000000e+00> : vector<16x128xf32>
    %2 = tpu.matmul %0, %1, %cst {dimension_numbers = #tpu.dot_dimension_numbers<[1], [0], [0], [1], [0, 0, 1, 1], [], []>} : vector<16x32xbf16>, vector<32x128xbf16>, vector<16x128xf32> -> vector<16x128xf32>
    %c0_3 = arith.constant 0 : index
    %c0_4 = arith.constant 0 : index
    %3 = vector.load %arg4[%c0_3, %c0_4] : memref<1x128xf32, #tpu.memory_space<vmem>>, vector<1x128xf32>
    %4 = vector.broadcast %3 : vector<1x128xf32> to vector<16x128xf32>
    %5 = arith.addf %2, %4 : vector<16x128xf32>
    %c0_5 = arith.constant 0 : index
    %c0_6 = arith.constant 0 : index
    %6 = vector.load %arg5[%c0_5, %c0_6] : memref<16x128xf32, #tpu.memory_space<vmem>>, vector<16x128xf32>
    tpu.vector_store %arg5[%c0_5, %c0_6], %5 {strides = array<i32>} : memref<16x128xf32, #tpu.memory_space<vmem>>, vector<16x128xf32>,
    return
  }
  func.func @transform_0(%arg0: i32, %arg1: i32) -> (i32, i32) {
    %c0_i32 = arith.constant 0 : i32
    %c0_i32_0 = arith.constant 0 : i32
    return %arg0, %c0_i32 : i32, i32
  }
  func.func @transform_1(%arg0: i32, %arg1: i32) -> (i32, i32) {
    %c0_i32 = arith.constant 0 : i32
    %c0_i32_0 = arith.constant 0 : i32
    return %c0_i32, %arg1 : i32, i32
  }
  func.func @transform_2(%arg0: i32, %arg1: i32) -> (i32, i32) {
    %c0_i32 = arith.constant 0 : i32
    %c0_i32_0 = arith.constant 0 : i32
    return %c0_i32, %arg1 : i32, i32
  }
  func.func @transform_3(%arg0: i32, %arg1: i32) -> (i32, i32) {
    %c0_i32 = arith.constant 0 : i32
    return %arg0, %arg1 : i32, i32
  }
}

</mosaic_0001>

<llo_original>
// kernel: forward.1
$region0: #{forward.1}
  #allocation0 [shape = 'u32[]', space=smem, size = 0x4, offset = 0x4, fixed_abs, tag = 'smem constant byte address 0x4 - core index']
  #allocation1 [shape = 'u32[72,128]{1,0:T(1,128)}', space=vmem, size = 0x9000, scoped, tag = 'internal scratch']
  %s0 = inlined_call_operand.vmem [shape: bf16[16,32], index: 0, kind: input, shape index: {}]
  %s1 = inlined_call_operand.vmem [shape: bf16[32,128], index: 1, kind: input, shape index: {}]
  %s2 = inlined_call_operand.vmem [shape: f32[1,128], index: 2, kind: input, shape index: {}]
  %s3 = inlined_call_operand.vmem [shape: f32[16,128], index: 3, kind: output, shape index: {}]
  %s4 = sld [smem:[#allocation0]]
  $region22: #{forward.1} parent=0
    _
  %s6 = ssub.s32 1, %s4
  %s7 = scalar_select 0, %s6, %s4
  // Predicated region
  $region2: #{forward.1} parent=0 // pred_check
    _
  $region3: #{forward.1} parent=0 // pred_check_branch
    %9 = sbr.rel (0) target = $region5
  $region4: #{forward.1} parent=0 // pred_region
    _
  $region5: #{forward.1} parent=0 // pred_fallthru
    _
  // Predicated region
  $region6: #{forward.1} parent=0 // pred_check
    _
  $region7: #{forward.1} parent=0 // pred_check_branch
    %11 = sbr.rel (0) target = $region9
  $region8: #{forward.1} parent=0 // pred_region
    _
  $region9: #{forward.1} parent=0 // pred_fallthru
    _
  // Predicated region
  $region10: #{forward.1} parent=0 // pred_check
    _
  $region11: #{forward.1} parent=0 // pred_check_branch
    %13 = sbr.rel (0) target = $region13
  $region12: #{forward.1} parent=0 // pred_region
    _
  $region13: #{forward.1} parent=0 // pred_fallthru
    _
  %v15 = vld [vmem:[%s0] sm:$0xf]
  %v16 = vld [vmem:[%s0 + $0x4] sm:$0xf]
  %v17 = vld [vmem:[%s1] sm:$0xf]
  %v18 = vld [vmem:[%s1 + $0x4] sm:$0xf]
  %v19 = vld [vmem:[%s1 + $0x8] sm:$0xf]
  %v20 = vld [vmem:[%s1 + $0xc] sm:$0xf]
  %v21 = vld [vmem:[%s2] sm:$0x1]
  %v23 = vperm.slane %v21, 0
  %v27 = vunpack.c.l.b16 %v15
  %v28 = vunpack.c.l.b16 %v16
  %v29 = vpack.c.b16 %v28, %v27
  %v34 = vunpack.c.l.b16 %v17
  %v35 = vunpack.c.l.b16 %v18
  %v36 = vunpack.c.l.b16 %v19
  %v37 = vunpack.c.l.b16 %v20
  %v38 = vpack.c.b16 %v35, %v34
  %v39 = vpack.c.b16 %v37, %v36
  %vm42 = vcmask 261120
  %v44 = vsel %vm42, %v29, 0
  %46 = vmatpush.bf16.msra.mxu0 0
  %47 = vmatpush.bf16.msra.mxu0 0
  %48 = vmatpush.bf16.msra.mxu0 0
  %49 = vmatpush.bf16.msra.mxu0 0
  %50 = vmatpush.bf16.msra.mxu0 0
  %51 = vmatpush.bf16.msra.mxu0 0
  %52 = vmatpush.bf16.msra.mxu0 %v39
  %53 = vmatpush.bf16.msra.mxu0 %v38
  %54 = vmatmul.bf16.gmra.mxu0 %v44
  %v55 = vpop.f32.mrf.mxu0
  %v56 = vadd.f32 %v23, %v55
  %v57 = vpop.f32.mrf.mxu0
  %v58 = vadd.f32 %v23, %v57
  %59 = vdwg.mxu0
  %60 = vst [vmem:[%s3] sm:$0xff] %v56
  %61 = vst [vmem:[%s3 + $0x8] sm:$0xff] %v58
  // Predicated region
  $region14: #{forward.1} parent=0 // pred_check
    _
  $region15: #{forward.1} parent=0 // pred_check_branch
    %63 = sbr.rel (0) target = $region17
  $region16: #{forward.1} parent=0 // pred_region
    _
  $region17: #{forward.1} parent=0 // pred_fallthru
    _
  // Predicated region
  $region18: #{forward.1} parent=0 // pred_check
    _
  $region19: #{forward.1} parent=0 // pred_check_branch
    %65 = sbr.rel (0) target = $region21
  $region20: #{forward.1} parent=0 // pred_region
    _
  $region21: #{forward.1} parent=0 // pred_fallthru
    _

</llo_original>
